<compile_context>
chip_gen: v7x
topology: tpu7x:2x2x1
jax: 0.10.0
libtpu: 0.0.40
codegen_flags: <defaults>
</compile_context>

<pallas_src>
import functools

import jax
import jax.numpy as jnp
from jax import lax
from jax.experimental import pallas as pl
from jax.experimental.pallas import tpu as pltpu


def _bce_kernel(x_ref, t_ref, m_ref, o_ref, *, length, tile_l, mask_cols):
    """One (tb, tl) tile: masked BCE-with-logits, row-sum accumulated into o_ref."""
    k = pl.program_id(1)                 # length-tile index (reduction axis, last)
    last = pl.num_programs(1) - 1

    @pl.when(k == 0)
    def _():
        o_ref[...] = jnp.zeros_like(o_ref)

    # all math in f32, matching `.float()` in the PyTorch forward
    x = x_ref[...].astype(jnp.float32)
    t = t_ref[...].astype(jnp.float32)
    m = m_ref[...].astype(jnp.float32)

    # numerically stable BCE-with-logits (PyTorch's formula), scaled by weight=mask:
    #   loss = max(x, 0) - x*t + log(1 + exp(-|x|))
    per_elem = m * (jnp.maximum(x, 0.0) - x * t + jnp.log1p(jnp.exp(-jnp.abs(x))))

    if mask_cols:
        # Only the last length tile reads padded columns; pay the iota/compare
        # /select only there.  Masking per_elem AFTER the math discards any
        # Inf/NaN produced by the garbage-padded inputs.
        @pl.when(k != last)
        def _():
            o_ref[...] += jnp.sum(per_elem, axis=1, keepdims=True)

        @pl.when(k == last)
        def _():
            col = k * tile_l + lax.broadcasted_iota(jnp.int32, per_elem.shape, 1)
            pe = jnp.where(col < length, per_elem, 0.0)
            o_ref[...] += jnp.sum(pe, axis=1, keepdims=True)
    else:
        o_ref[...] += jnp.sum(per_elem, axis=1, keepdims=True)

    @pl.when(k == last)
    def _():
        # mean over dim=1 (divide by the full, unpadded length)
        o_ref[...] *= jnp.float32(1.0 / length)


def _choose_tiles(B, L, bpe, batch_tile=None, length_tile=None):
    """Pick (tb, tl) around ~4 MiB of live input per grid step."""
    TARGET = 4 << 20        # per-step input bytes sweet spot (~85%+ of HBM roofline)
    ROW_ALIGN = 32          # lcm of f32(8)/bf16(16)/int8(32) sublane packing

    # ---- length tile ----
    if length_tile is not None:
        tl = int(length_tile)
        tl = L if tl >= L else max(128, (tl // 128) * 128)
    elif L <= 4096 or 32 * L * bpe <= TARGET:
        tl = L                                   # full rows: no column masking
    else:
        tl = min(4096, max(128, (TARGET // (32 * bpe)) // 128 * 128))

    # ---- batch tile ----
    if batch_tile is not None:
        tb = int(batch_tile)
        tb = B if tb >= B else max(8, (tb // 8) * 8)
        return tb, tl

    tb = max(ROW_ALIGN, (TARGET // max(tl * bpe, 1)) // ROW_ALIGN * ROW_ALIGN)
    if tb >= B:
        tb = B
        # small-B: grow the length tile so each step still moves ~TARGET bytes
        if tl < L and tb * tl * bpe < TARGET:
            want = -(-(TARGET // max(tb * bpe, 1)) // 128) * 128
            tl = L if want >= L else want
        # megacore (v7x: 2 TensorCores): split batch in two if each half still
        # carries enough bytes (>= ~1 MiB) to amortize per-step overhead
        half = -(-B // 2)
        half = -(-half // ROW_ALIGN) * ROW_ALIGN
        if half < B and half * tl * bpe >= (1 << 20):
            tb = half
    return tb, tl


def sigmoid_bce_loss(inputs, targets, mask, *, batch_tile=None, length_tile=None):
    """Equivalent of SigmoidBinaryCrossEntropyLoss.forward(inputs, targets, mask).

    inputs/targets/mask: [batch, length].  targets/mask may be int8/bf16/etc.
    (0/1 values) — passing them narrow cuts HBM traffic; everything is upcast
    to f32 inside the kernel.  Returns f32 [batch].
    """
    B, L = inputs.shape
    assert targets.shape == (B, L) and mask.shape == (B, L)

    bpe = inputs.dtype.itemsize + targets.dtype.itemsize + mask.dtype.itemsize
    tb, tl = _choose_tiles(B, L, bpe, batch_tile, length_tile)

    grid = (pl.cdiv(B, tb), pl.cdiv(L, tl))
    mask_cols = (L % tl) != 0

    kernel = functools.partial(_bce_kernel, length=L, tile_l=tl, mask_cols=mask_cols)

    # >= ~4x the double-buffered input tiles, leaving room for f32 upcast temps;
    # always well under v7x's 64 MiB physical VMEM, and raises v5e's 16 MiB default.
    step_bytes = tb * tl * bpe
    vmem_limit = int(min(56 << 20, max(32 << 20, 8 * step_bytes)))

    out = pl.pallas_call(
        kernel,
        out_shape=jax.ShapeDtypeStruct((B, 1), jnp.float32),
        grid_spec=pltpu.PrefetchScalarGridSpec(
            num_scalar_prefetch=0,
            grid=grid,
            in_specs=[
                pl.BlockSpec((tb, tl), lambda i, k: (i, k)),
                pl.BlockSpec((tb, tl), lambda i, k: (i, k)),
                pl.BlockSpec((tb, tl), lambda i, k: (i, k)),
            ],
            out_specs=pl.BlockSpec((tb, 1), lambda i, k: (i, 0)),
        ),
        compiler_params=pltpu.CompilerParams(
            dimension_semantics=("parallel", "arbitrary"),
            vmem_limit_bytes=vmem_limit,
        ),
    )(inputs, targets, mask)
    return out[:, 0]  # shape [batch], like res.mean(dim=1)


def _ref_loss(x, t, m):
    x = x.astype(jnp.float32)
    t = t.astype(jnp.float32)
    m = m.astype(jnp.float32)
    return jnp.mean(
        m * (jnp.maximum(x, 0.0) - x * t + jnp.log1p(jnp.exp(-jnp.abs(x)))), axis=1
    )


if __name__ == "__main__":
    key = jax.random.PRNGKey(0)
    k1, k2, k3 = jax.random.split(key, 3)

    # --- small, single-tile case ---
    batch, length = 8, 128
    inputs = jax.random.normal(k1, (batch, length), dtype=jnp.float32) * 2.0
    # targets / mask are exactly 0/1 -> pass as int8 to cut HBM bytes (kernel upcasts)
    targets = (jax.random.uniform(k2, (batch, length)) > 0.5).astype(jnp.int8)
    mask = (jax.random.uniform(k3, (batch, length)) > 0.25).astype(jnp.int8)

    loss = sigmoid_bce_loss(inputs, targets, mask)
    jax.block_until_ready(loss)
    assert loss.shape == (batch,)
    assert jnp.allclose(loss, _ref_loss(inputs, targets, mask), atol=1e-5, rtol=1e-5)

    # --- multi-block path: partial batch tile AND partial length tile (col mask) ---
    kb1, kb2, kb3 = jax.random.split(jax.random.PRNGKey(1), 3)
    B2, L2 = 40, 200
    x2 = jax.random.normal(kb1, (B2, L2), dtype=jnp.float32) * 3.0
    t2 = (jax.random.uniform(kb2, (B2, L2)) > 0.5).astype(jnp.int8)
    m2 = (jax.random.uniform(kb3, (B2, L2)) > 0.25).astype(jnp.int8)
    loss2 = sigmoid_bce_loss(x2, t2, m2, batch_tile=32, length_tile=128)
    jax.block_until_ready(loss2)
    assert loss2.shape == (B2,)
    assert jnp.allclose(loss2, _ref_loss(x2, t2, m2), atol=1e-5, rtol=1e-5)

    # --- dtype generality: bf16 targets/mask still work ---
    loss3 = sigmoid_bce_loss(
        inputs, targets.astype(jnp.bfloat16), mask.astype(jnp.bfloat16)
    )
    jax.block_until_ready(loss3)
    assert jnp.allclose(loss3, _ref_loss(inputs, targets, mask), atol=1e-5, rtol=1e-5)

    print("KERNEL_OK")
</pallas_src>

<mosaic_0001>
module attributes {stable_mosaic.version = 11 : i64} {
  func.func @_bce_kernel(%arg0: i32, %arg1: i32, %arg2: memref<8x128xf32, #tpu.memory_space<vmem>>, %arg3: memref<8x128xi8, #tpu.memory_space<vmem>>, %arg4: memref<8x128xi8, #tpu.memory_space<vmem>>, %arg5: memref<8x1xf32, #tpu.memory_space<vmem>>) attributes {dimension_semantics = [#tpu.dimension_semantics<parallel>, #tpu.dimension_semantics<arbitrary>], iteration_bounds = array<i64: 1, 1>, scalar_prefetch = 0 : i64, scratch_operands = 0 : i64, tpu.core_type = #tpu.core_type<tc>, window_params = [{transform_indices = @transform_0, window_bounds = array<i64: 8, 128>}, {transform_indices = @transform_1, window_bounds = array<i64: 8, 128>}, {transform_indices = @transform_2, window_bounds = array<i64: 8, 128>}, {transform_indices = @transform_3, window_bounds = array<i64: 8, 1>}]} {
    %c0_i32 = arith.constant 0 : i32
    %0 = arith.cmpi eq, %arg1, %c0_i32 : i32
    %1 = arith.extui %0 : i1 to i32
    %c0_i32_0 = arith.constant 0 : i32
    %2 = arith.cmpi ne, %1, %c0_i32_0 : i32
    scf.if %2 {
      %cst_14 = arith.constant 0.000000e+00 : f32
      %27 = vector.broadcast %cst_14 : f32 to vector<8x1xf32>
      %c0_15 = arith.constant 0 : index
      %c0_16 = arith.constant 0 : index
      %28 = vector.load %arg5[%c0_15, %c0_16] : memref<8x1xf32, #tpu.memory_space<vmem>>, vector<8x1xf32>
      tpu.vector_store %arg5[%c0_15, %c0_16], %27 {strides = array<i32>} : memref<8x1xf32, #tpu.memory_space<vmem>>, vector<8x1xf32>,
    } else {
    }
    %c0 = arith.constant 0 : index
    %c0_1 = arith.constant 0 : index
    %3 = vector.load %arg2[%c0, %c0_1] : memref<8x128xf32, #tpu.memory_space<vmem>>, vector<8x128xf32>
    %c0_2 = arith.constant 0 : index
    %c0_3 = arith.constant 0 : index
    %4 = vector.load %arg3[%c0_2, %c0_3] : memref<8x128xi8, #tpu.memory_space<vmem>>, vector<8x128xi8>
    %5 = arith.sitofp %4 : vector<8x128xi8> to vector<8x128xf32>
    %c0_4 = arith.constant 0 : index
    %c0_5 = arith.constant 0 : index
    %6 = vector.load %arg4[%c0_4, %c0_5] : memref<8x128xi8, #tpu.memory_space<vmem>>, vector<8x128xi8>
    %7 = arith.sitofp %6 : vector<8x128xi8> to vector<8x128xf32>
    %cst = arith.constant 0.000000e+00 : f32
    %8 = vector.broadcast %cst : f32 to vector<8x128xf32>
    %9 = arith.maximumf %3, %8 : vector<8x128xf32>
    %10 = arith.mulf %3, %5 : vector<8x128xf32>
    %11 = arith.subf %9, %10 : vector<8x128xf32>
    %12 = math.absf %3 : vector<8x128xf32>
    %cst_6 = arith.constant 0.000000e+00 : f32
    %13 = vector.broadcast %cst_6 : f32 to vector<8x128xf32>
    %14 = arith.subf %13, %12 : vector<8x128xf32>
    %15 = math.exp %14 : vector<8x128xf32>
    %16 = math.log1p %15 : vector<8x128xf32>
    %17 = arith.addf %11, %16 : vector<8x128xf32>
    %18 = arith.mulf %7, %17 : vector<8x128xf32>
    %c0_7 = arith.constant 0 : index
    %c0_8 = arith.constant 0 : index
    %19 = vector.load %arg5[%c0_7, %c0_8] : memref<8x1xf32, #tpu.memory_space<vmem>>, vector<8x1xf32>
    %cst_9 = arith.constant dense<0.000000e+00> : vector<8xf32>
    %20 = vector.multi_reduction <add>, %18, %cst_9 [1] : vector<8x128xf32> to vector<8xf32>
    %21 = vector.shape_cast %20 : vector<8xf32> to vector<8x1xf32>
    %22 = arith.addf %19, %21 : vector<8x1xf32>
    %c0_10 = arith.constant 0 : index
    %c0_11 = arith.constant 0 : index
    %23 = vector.load %arg5[%c0_10, %c0_11] : memref<8x1xf32, #tpu.memory_space<vmem>>, vector<8x1xf32>
    tpu.vector_store %arg5[%c0_10, %c0_11], %22 {strides = array<i32>} : memref<8x1xf32, #tpu.memory_space<vmem>>, vector<8x1xf32>,
    %c0_i32_12 = arith.constant 0 : i32
    %24 = arith.cmpi eq, %arg1, %c0_i32_12 : i32
    %25 = arith.extui %24 : i1 to i32
    %c0_i32_13 = arith.constant 0 : i32
    %26 = arith.cmpi ne, %25, %c0_i32_13 : i32
    scf.if %26 {
      %c0_14 = arith.constant 0 : index
      %c0_15 = arith.constant 0 : index
      %27 = vector.load %arg5[%c0_14, %c0_15] : memref<8x1xf32, #tpu.memory_space<vmem>>, vector<8x1xf32>
      %cst_16 = arith.constant 7.812500e-03 : f32
      %28 = vector.broadcast %cst_16 : f32 to vector<8x1xf32>
      %29 = arith.mulf %27, %28 : vector<8x1xf32>
      %c0_17 = arith.constant 0 : index
      %c0_18 = arith.constant 0 : index
      %30 = vector.load %arg5[%c0_17, %c0_18] : memref<8x1xf32, #tpu.memory_space<vmem>>, vector<8x1xf32>
      tpu.vector_store %arg5[%c0_17, %c0_18], %29 {strides = array<i32>} : memref<8x1xf32, #tpu.memory_space<vmem>>, vector<8x1xf32>,
    } else {
    }
    return
  }
  func.func @transform_0(%arg0: i32, %arg1: i32) -> (i32, i32) {
    %c0_i32 = arith.constant 0 : i32
    return %arg0, %arg1 : i32, i32
  }
  func.func @transform_1(%arg0: i32, %arg1: i32) -> (i32, i32) {
    %c0_i32 = arith.constant 0 : i32
    return %arg0, %arg1 : i32, i32
  }
  func.func @transform_2(%arg0: i32, %arg1: i32) -> (i32, i32) {
    %c0_i32 = arith.constant 0 : i32
    return %arg0, %arg1 : i32, i32
  }
  func.func @transform_3(%arg0: i32, %arg1: i32) -> (i32, i32) {
    %c0_i32 = arith.constant 0 : i32
    %c0_i32_0 = arith.constant 0 : i32
    return %arg0, %c0_i32 : i32, i32
  }
}

</mosaic_0001>

<llo_original>
// kernel: tpu_custom_call.1
$region0: #{tpu_custom_call.1}
  #allocation0 [shape = 'u32[]', space=smem, size = 0x4, offset = 0x4, fixed_abs, tag = 'smem constant byte address 0x4 - core index']
  #allocation1 [shape = 'u32[144,128]{1,0:T(1,128)}', space=vmem, size = 0x12000, scoped, tag = 'internal scratch']
  %s0 = inlined_call_operand.hbm [shape: f32[8,128], index: 0, kind: input, shape index: {}]
  %s1 = inlined_call_operand.vmem [shape: s8[8,128], index: 1, kind: input, shape index: {}]
  %s2 = inlined_call_operand.vmem [shape: s8[8,128], index: 2, kind: input, shape index: {}]
  %s3 = inlined_call_operand.vmem [shape: f32[8,1], index: 3, kind: output, shape index: {}]
  %s4 = sld [smem:[#allocation0]]
  $region34: #{tpu_custom_call.1} parent=0
    _
  %s6 = ssub.s32 1, %s4
  %s7 = scalar_select 0, %s6, %s4
  $region1: #{tpu_custom_call.1} parent=0
    #allocation2 [shape = 'u8[4096]{0}', space=vmem, size = 0x1000, scoped, tag = 'input window, operand 0, single buffered']
    #allocation3 [shape = 's32[1]{0}', space=sflag, size = 0x4, scoped, tag = 'scoped memory for tpu_custom_call.1']
    %8 = vsyncpa [#allocation3], 0
    // Predicated region
    $region2: #{tpu_custom_call.1} parent=1 // pred_check
      _
    $region3: #{tpu_custom_call.1} parent=1 // pred_check_branch
      %10 = sbr.rel (0) target = $region5
    $region4: #{tpu_custom_call.1} parent=1 // pred_region
      %s12 = ssub.s32 128, 128
      %13 = vsyncadd [#allocation3], %s12
      %s15 = sshll.u32 [#allocation2], 4
      %s16 = int_to_ptr.vmem [resolvable:$true] %s15
      %18 = dma.hbm_to_vmem [thread:$0]  %s0, 128, %s16, [#allocation3]
    $region5: #{tpu_custom_call.1} parent=1 // pred_fallthru
      _
    // Predicated region
    $region6: #{tpu_custom_call.1} parent=1 // pred_check
      _
    $region7: #{tpu_custom_call.1} parent=1 // pred_check_branch
      %20 = sbr.rel (0) target = $region9
    $region8: #{tpu_custom_call.1} parent=1 // pred_region
      _
    $region9: #{tpu_custom_call.1} parent=1 // pred_fallthru
      _
    // Predicated region
    $region10: #{tpu_custom_call.1} parent=1 // pred_check
      _
    $region11: #{tpu_custom_call.1} parent=1 // pred_check_branch
      %22 = sbr.rel (0) target = $region13
    $region12: #{tpu_custom_call.1} parent=1 // pred_region
      _
    $region13: #{tpu_custom_call.1} parent=1 // pred_fallthru
      _
    // Predicated region
    $region14: #{tpu_custom_call.1} parent=1 // pred_check
      _
    $region15: #{tpu_custom_call.1} parent=1 // pred_check_branch
      %24 = sbr.rel (0) target = $region17
    $region16: #{tpu_custom_call.1} parent=1 // pred_region
      %25 = dma.done [#allocation3], 128
    $region17: #{tpu_custom_call.1} parent=1 // pred_fallthru
      _
    %p26 = scmp.eq.s32.totalorder 0, 0
    // Predicated region
    $region18: #{tpu_custom_call.1} parent=1 // pred_check
      %p27 = pneg %p26
    $region19: #{tpu_custom_call.1} parent=1 // pred_check_branch
      %29 = sbr.rel (%p27) target = $region21
    $region20: #{tpu_custom_call.1} parent=1 // pred_region
      %vm30 = vcmask 7168
      %31 = vst.msk [vmem:[%s3] sm:$0xff] %vm30, 0.0
    $region21: #{tpu_custom_call.1} parent=1 // pred_fallthru
      _
    %v32 = vld [vmem:[#allocation2] sm:$0xff]
    %v33 = vld [vmem:[%s1] sm:$0x3]
    %v34 = vunpack.c.0.s8 %v33
    %v35 = vcvt.s32.f32 %v34
    %v36 = vld [vmem:[%s2] sm:$0x3]
    %v37 = vunpack.c.0.s8 %v36
    %v38 = vcvt.s32.f32 %v37
    %v39 = vmax.f32 %v32, 0.0
    %v40 = vmul.f32 %v32, %v35
    %v41 = vsub.f32 %v39, %v40
    %v42 = vand.u32 2147483647, %v32
    %v43 = vsub.f32 0.0, %v42
    %v44 = vmul.f32 %v43, 1.442695
    %v45 = vpow.pop %v44
    %v46 = vadd.f32 %v45, 1.0
    %v47 = vlog2.pop %v46
    %v48 = vmul.f32 %v47, 0.6931472
    %v49 = vmul.f32 -0.5, %v45
    %v50 = vadd.f32 %v49, 1.0
    %v51 = vmul.f32 %v50, %v45
    %v52 = vand.u32 2147483647, %v45
    %vm53 = vcmp.lt.f32.partialorder %v52, 0.0004427343
    %v54 = vsel %vm53, %v51, %v48
    %v55 = vadd.f32 %v41, %v54
    %v56 = vmul.f32 %v38, %v55
    %v57 = vld [vmem:[%s3] sm:$0xff]
    %58 = vadd.xlane.f32.xlu0 %v56
    %v59 = vpop.xlane.xlu0 %58
    %v60 = vadd.f32 %v57, %v59
    %vm61 = vcmask 7168
    %62 = vst.msk [vmem:[%s3] sm:$0xff] %vm61, %v60
    // Predicated region
    $region22: #{tpu_custom_call.1} parent=1 // pred_check
      %p63 = pneg %p26
    $region23: #{tpu_custom_call.1} parent=1 // pred_check_branch
      %65 = sbr.rel (%p63) target = $region25
    $region24: #{tpu_custom_call.1} parent=1 // pred_region
      %v66 = vld [vmem:[%s3] sm:$0xff]
      %v67 = vmul.f32 %v66, 0.0078125
      %68 = vst.msk [vmem:[%s3] sm:$0xff] %vm61, %v67
    $region25: #{tpu_custom_call.1} parent=1 // pred_fallthru
      _
    // Predicated region
    $region26: #{tpu_custom_call.1} parent=1 // pred_check
      _
    $region27: #{tpu_custom_call.1} parent=1 // pred_check_branch
      %70 = sbr.rel (0) target = $region29
    $region28: #{tpu_custom_call.1} parent=1 // pred_region
      _
    $region29: #{tpu_custom_call.1} parent=1 // pred_fallthru
      _
    // Predicated region
    $region30: #{tpu_custom_call.1} parent=1 // pred_check
      _
    $region31: #{tpu_custom_call.1} parent=1 // pred_check_branch
      %72 = sbr.rel (0) target = $region33
    $region32: #{tpu_custom_call.1} parent=1 // pred_region
      _
    $region33: #{tpu_custom_call.1} parent=1 // pred_fallthru
      _
    %73 = vsyncpa [#allocation3], 1

</llo_original>
